<compile_context>
chip_gen: v5e
topology: v5e:2x2
jax: 0.10.0
libtpu: 0.0.40
codegen_flags: <defaults>
</compile_context>

<pallas_src>
import functools

import jax
import jax.numpy as jnp
from jax.experimental import pallas as pl
from jax.experimental.pallas import tpu as pltpu

_LANES = 128
_MIB = 1 << 20


def _round_up(v: int, m: int) -> int:
    return ((v + m - 1) // m) * m


def _sublanes_for(dtype) -> int:
    # Sub-32-bit dtypes pack along sublanes: 2-byte needs 16-row, 1-byte 32-row
    # granularity to avoid packed/masked row handling.
    return {4: 8, 2: 16, 1: 32}.get(jnp.dtype(dtype).itemsize, 8)


def _chip_defaults():
    """Returns (target bytes per operand per grid step, minimum grid steps)."""
    try:
        kind = jax.devices()[0].device_kind.lower()
    except Exception:  # pragma: no cover - defensive; default to v6e-style tiles
        kind = ""
    if "v7" in kind or "7x" in kind:
        # v7x: ~3.2 TB/s HBM per TC -> bigger tiles amortize the fixed per-step
        # overhead; 2 TensorCores -> force >= 4 steps so each TC keeps >= 2
        # pipelined steps (DMA/compute/writeback overlap per core).
        return 4 * _MIB, 4
    if "v5 lite" in kind or "v5lite" in kind or "v5e" in kind:
        # v5e: slowest HBM (per-step overhead already <10% at 1 MiB tiles) and
        # the tightest scoped-VMEM default -> keep tiles small.
        return 1 * _MIB, 1
    # v6e (and unknown chips): 2 MiB/operand is already past the bandwidth knee.
    return 2 * _MIB, 1


def _combi_kernel(x_ref, y_ref, o_ref, *, alpha):
    # Compute in f32 (VALU slots are free; the kernel is HBM-bound), cast on store.
    x = x_ref[...].astype(jnp.float32)
    y = y_ref[...].astype(jnp.float32)
    ad = jnp.abs(x - y)
    # alpha*d^2 + (1-alpha)*|d| == |d| * (alpha*|d| + (1-alpha))  (abs + FMA + mul)
    o_ref[...] = (ad * (alpha * ad + (1.0 - alpha))).astype(o_ref.dtype)


def _tail_math(xt, yt, alpha, dtype):
    # Tiny (< sublanes*128 elements) leftover handled with plain jnp; same
    # f32-compute / cast-on-store numerics as the kernel.
    d = xt.astype(jnp.float32) - yt.astype(jnp.float32)
    ad = jnp.abs(d)
    return (ad * (alpha * ad + (1.0 - alpha))).astype(dtype)


def _run_slab(x2, y2, alpha, rows, dtype):
    """Run the elementwise kernel on an aligned (rows, 128) slab."""
    itemsize = jnp.dtype(dtype).itemsize
    sub = _sublanes_for(dtype)
    target_bytes, min_steps = _chip_defaults()

    # Bytes-based tile rows (constant MiB per operand for any dtype width).
    tr = max(sub, (target_bytes // (_LANES * itemsize)) // sub * sub)
    tr = min(tr, rows)
    tr = _round_up(tr, sub)

    # v7x only: keep >= min_steps grid steps (>= 2 pipelined steps per TC)
    # when there is enough work; never degrade below one sublane group.
    if min_steps > 1 and rows >= min_steps * sub and pl.cdiv(rows, tr) < min_steps:
        tr = max(sub, _round_up(pl.cdiv(rows, min_steps), sub))

    # Prefer a tr that divides rows so the last block is a full (unmasked)
    # store; only accept a divisor that keeps >= half the target tile.
    r_groups = rows // sub
    kmax = tr // sub
    for k in range(kmax, max(kmax // 2, 1) - 1, -1):
        if r_groups % k == 0:
            tr = k * sub
            break

    steps = pl.cdiv(rows, tr)

    # Explicit VMEM budget: 3 operands x 2 pipeline buffers x tile, +20% and a
    # couple of MiB for compiler scratch.  Never relies on the scoped default.
    vmem_limit = int(1.2 * (3 * 2 * tr * _LANES * itemsize)) + 2 * _MIB
    vmem_limit = min(vmem_limit, 64 * _MIB)

    cost = pl.CostEstimate(
        flops=5 * rows * _LANES,
        transcendentals=0,
        bytes_accessed=3 * rows * _LANES * itemsize,
    )

    kernel = functools.partial(_combi_kernel, alpha=alpha)

    return pl.pallas_call(
        kernel,
        out_shape=jax.ShapeDtypeStruct((rows, _LANES), dtype),
        grid_spec=pltpu.PrefetchScalarGridSpec(
            num_scalar_prefetch=0,
            grid=(steps,),
            in_specs=[
                pl.BlockSpec((tr, _LANES), lambda i: (i, 0)),
                pl.BlockSpec((tr, _LANES), lambda i: (i, 0)),
            ],
            out_specs=pl.BlockSpec((tr, _LANES), lambda i: (i, 0)),
        ),
        compiler_params=pltpu.CompilerParams(
            # "parallel" lets the runtime shard the grid across v7x's 2 TCs;
            # on single-TC v5e/v6e it is a no-op (measured).
            dimension_semantics=("parallel",),
            vmem_limit_bytes=vmem_limit,
        ),
        cost_estimate=cost,
    )(x2, y2)


def combi_loss(x, y, alpha: float = 1.0):
    """Elementwise combined MSE/MAE loss. x, y: same shape (e.g. NCHW)."""
    assert x.shape == y.shape, "x and y must have the same shape"
    orig_shape = x.shape
    dtype = x.dtype
    n = x.size
    if n == 0:
        return jnp.zeros(orig_shape, dtype)

    alpha = float(alpha)  # construction-time constant (see module docstring)

    sub = _sublanes_for(dtype)
    chunk = sub * _LANES

    xf = x.reshape(-1)
    yf = y.reshape(-1)

    n_aligned = (n // chunk) * chunk

    if n_aligned == n:
        # Aligned fast path: pure (free) reshape, no pad / slice copies.
        rows = n // _LANES
        out = _run_slab(xf.reshape(rows, _LANES), yf.reshape(rows, _LANES),
                        alpha, rows, dtype).reshape(-1)
    elif n_aligned == 0:
        # Entire input is smaller than one sublane group: plain jnp.
        out = _tail_math(xf, yf, alpha, dtype)
    else:
        # Ragged: aligned prefix through the kernel, tiny tail in plain jnp,
        # stitch.  Avoids the 2-3x extra HBM traffic of padding full arrays.
        rows = n_aligned // _LANES
        head = _run_slab(xf[:n_aligned].reshape(rows, _LANES),
                         yf[:n_aligned].reshape(rows, _LANES),
                         alpha, rows, dtype).reshape(-1)
        tail = _tail_math(xf[n_aligned:], yf[n_aligned:], alpha, dtype)
        out = jnp.concatenate([head, tail])

    return out.reshape(orig_shape)


def combi_loss_ref(x, y, alpha: float = 1.0):
    d = x.astype(jnp.float32) - y.astype(jnp.float32)
    return (alpha * (d * d) + (1.0 - alpha) * jnp.abs(d)).astype(x.dtype)


if __name__ == "__main__":
    key = jax.random.PRNGKey(0)
    kx, ky = jax.random.split(key)

    # Small NCHW shapes consistent with a pixelwise loss (aligned fast path).
    x = jax.random.normal(kx, (2, 4, 16, 16), dtype=jnp.float32)
    y = jax.random.normal(ky, (2, 4, 16, 16), dtype=jnp.float32)
    alpha = 0.7  # exercise both the MSE and MAE branches
    out = jax.block_until_ready(combi_loss(x, y, alpha=alpha))
    ref = combi_loss_ref(x, y, alpha=alpha)
    assert out.shape == x.shape and out.dtype == x.dtype
    assert jnp.allclose(out, ref, atol=1e-6, rtol=1e-6), "mismatch (aligned)"

    # Ragged-size check: aligned prefix through the kernel + jnp tail, stitched.
    xr = jax.random.normal(kx, (2, 3, 17, 11), dtype=jnp.float32)
    yr = jax.random.normal(ky, (2, 3, 17, 11), dtype=jnp.float32)
    out_r = jax.block_until_ready(combi_loss(xr, yr, alpha=0.25))
    assert out_r.shape == xr.shape
    assert jnp.allclose(out_r, combi_loss_ref(xr, yr, alpha=0.25),
                        atol=1e-6, rtol=1e-6), "mismatch (ragged)"

    # bf16 check (bytes-based tiling / 16-row sublane granularity).
    xb = jax.random.normal(kx, (2, 4, 32, 32), dtype=jnp.bfloat16)
    yb = jax.random.normal(ky, (2, 4, 32, 32), dtype=jnp.bfloat16)
    out_b = jax.block_until_ready(combi_loss(xb, yb, alpha=0.5))
    assert out_b.shape == xb.shape and out_b.dtype == jnp.bfloat16
    assert jnp.allclose(out_b.astype(jnp.float32),
                        combi_loss_ref(xb, yb, alpha=0.5).astype(jnp.float32),
                        atol=2e-2, rtol=2e-2), "mismatch (bf16)"

    print("KERNEL_OK")
</pallas_src>

<mosaic_0001>
module attributes {stable_mosaic.version = 11 : i64} {
  func.func @_combi_kernel(%arg0: i32, %arg1: memref<16x128xf32, #tpu.memory_space<vmem>>, %arg2: memref<16x128xf32, #tpu.memory_space<vmem>>, %arg3: memref<16x128xf32, #tpu.memory_space<vmem>>) attributes {dimension_semantics = [#tpu.dimension_semantics<parallel>], iteration_bounds = array<i64: 1>, scalar_prefetch = 0 : i64, scratch_operands = 0 : i64, tpu.core_type = #tpu.core_type<tc>, window_params = [{transform_indices = @transform_0, window_bounds = array<i64: 16, 128>}, {transform_indices = @transform_1, window_bounds = array<i64: 16, 128>}, {transform_indices = @transform_2, window_bounds = array<i64: 16, 128>}]} {
    %c0 = arith.constant 0 : index
    %c0_0 = arith.constant 0 : index
    %0 = vector.load %arg1[%c0, %c0_0] : memref<16x128xf32, #tpu.memory_space<vmem>>, vector<16x128xf32>
    %c0_1 = arith.constant 0 : index
    %c0_2 = arith.constant 0 : index
    %1 = vector.load %arg2[%c0_1, %c0_2] : memref<16x128xf32, #tpu.memory_space<vmem>>, vector<16x128xf32>
    %2 = arith.subf %0, %1 : vector<16x128xf32>
    %3 = math.absf %2 : vector<16x128xf32>
    %cst = arith.constant 0.699999988 : f32
    %4 = vector.broadcast %cst : f32 to vector<16x128xf32>
    %5 = arith.mulf %4, %3 : vector<16x128xf32>
    %cst_3 = arith.constant 3.000000e-01 : f32
    %6 = vector.broadcast %cst_3 : f32 to vector<16x128xf32>
    %7 = arith.addf %5, %6 : vector<16x128xf32>
    %8 = arith.mulf %3, %7 : vector<16x128xf32>
    %c0_4 = arith.constant 0 : index
    %c0_5 = arith.constant 0 : index
    %9 = vector.load %arg3[%c0_4, %c0_5] : memref<16x128xf32, #tpu.memory_space<vmem>>, vector<16x128xf32>
    tpu.vector_store %arg3[%c0_4, %c0_5], %8 {strides = array<i32>} : memref<16x128xf32, #tpu.memory_space<vmem>>, vector<16x128xf32>,
    return
  }
  func.func @transform_0(%arg0: i32) -> (i32, i32) {
    %c0_i32 = arith.constant 0 : i32
    %c0_i32_0 = arith.constant 0 : i32
    return %arg0, %c0_i32 : i32, i32
  }
  func.func @transform_1(%arg0: i32) -> (i32, i32) {
    %c0_i32 = arith.constant 0 : i32
    %c0_i32_0 = arith.constant 0 : i32
    return %arg0, %c0_i32 : i32, i32
  }
  func.func @transform_2(%arg0: i32) -> (i32, i32) {
    %c0_i32 = arith.constant 0 : i32
    %c0_i32_0 = arith.constant 0 : i32
    return %arg0, %c0_i32 : i32, i32
  }
}

</mosaic_0001>

<llo_original>
// kernel: tpu_custom_call.1
$region0: #{tpu_custom_call.1}
  #allocation0 [shape = 'u32[]', space=smem, size = 0x4, offset = 0x4, fixed_abs, tag = 'smem constant byte address 0x4 - core index']
  #allocation1 [shape = 'u32[72,128]{1,0:T(1,128)}', space=vmem, size = 0x9000, scoped, tag = 'internal scratch']
  %s0 = inlined_call_operand.hbm [shape: f32[16,128], index: 0, kind: input, shape index: {}]
  %s1 = inlined_call_operand.hbm [shape: f32[16,128], index: 1, kind: input, shape index: {}]
  %s2 = inlined_call_operand.hbm [shape: f32[16,128], index: 2, kind: output, shape index: {}]
  %s3 = sld [smem:[#allocation0]]
  $region26: #{tpu_custom_call.1} parent=0
    _
  %s5 = ssub.s32 1, %s3
  %s6 = scalar_select 0, %s5, %s3
  $region1: #{tpu_custom_call.1} parent=0
    #allocation2 [shape = 'u8[8192]{0}', space=vmem, size = 0x2000, scoped, tag = 'input window, operand 0, single buffered']
    #allocation3 [shape = 's32[1]{0}', space=sflag, size = 0x4, scoped, tag = 'scoped memory for tpu_custom_call.1']
    #allocation4 [shape = 's32[1]{0}', space=sflag, size = 0x4, scoped, tag = 'scoped memory for tpu_custom_call.1']
    #allocation5 [shape = 'u8[8192]{0}', space=vmem, size = 0x2000, scoped, tag = 'input window, operand 1, single buffered']
    #allocation6 [shape = 's32[1]{0}', space=sflag, size = 0x4, scoped, tag = 'scoped memory for tpu_custom_call.1']
    #allocation7 [shape = 'u8[8192]{0}', space=vmem, size = 0x2000, scoped, tag = 'output window, operand 0, single buffered']
    %7 = vsyncpa [#allocation3], 0
    %8 = vsyncpa [#allocation6], 0
    %9 = vsyncpa [#allocation4], 0
    // Predicated region
    $region2: #{tpu_custom_call.1} parent=1 // pred_check
      _
    $region3: #{tpu_custom_call.1} parent=1 // pred_check_branch
      %11 = sbr.rel (0) target = $region5
    $region4: #{tpu_custom_call.1} parent=1 // pred_region
      %13 = vsyncadd [#allocation3], 0
      %s14 = sshll.u32 %s0, 4
      %s15 = int_to_ptr.hbm [resolvable:$true] %s14
      %s16 = sshll.u32 [#allocation2], 4
      %s17 = int_to_ptr.vmem [resolvable:$true] %s16
      %22 = dma.hbm_to_vmem [thread:$0]  %s15, 256, %s17, [#allocation3], 128, 128, 8
    $region5: #{tpu_custom_call.1} parent=1 // pred_fallthru
      _
    // Predicated region
    $region6: #{tpu_custom_call.1} parent=1 // pred_check
      _
    $region7: #{tpu_custom_call.1} parent=1 // pred_check_branch
      %24 = sbr.rel (0) target = $region9
    $region8: #{tpu_custom_call.1} parent=1 // pred_region
      %26 = vsyncadd [#allocation6], 0
      %s27 = sshll.u32 %s1, 4
      %s28 = int_to_ptr.hbm [resolvable:$true] %s27
      %s29 = sshll.u32 [#allocation5], 4
      %s30 = int_to_ptr.vmem [resolvable:$true] %s29
      %35 = dma.hbm_to_vmem [thread:$0]  %s28, 256, %s30, [#allocation6], 128, 128, 8
    $region9: #{tpu_custom_call.1} parent=1 // pred_fallthru
      _
    // Predicated region
    $region10: #{tpu_custom_call.1} parent=1 // pred_check
      _
    $region11: #{tpu_custom_call.1} parent=1 // pred_check_branch
      %37 = sbr.rel (0) target = $region13
    $region12: #{tpu_custom_call.1} parent=1 // pred_region
      %39 = dma.done [#allocation3], 256
    $region13: #{tpu_custom_call.1} parent=1 // pred_fallthru
      _
    // Predicated region
    $region14: #{tpu_custom_call.1} parent=1 // pred_check
      _
    $region15: #{tpu_custom_call.1} parent=1 // pred_check_branch
      %41 = sbr.rel (0) target = $region17
    $region16: #{tpu_custom_call.1} parent=1 // pred_region
      %43 = dma.done [#allocation6], 256
    $region17: #{tpu_custom_call.1} parent=1 // pred_fallthru
      _
    %v44 = vld [vmem:[#allocation2] sm:$0xff]
    %v45 = vld [vmem:[#allocation2 + $0x8] sm:$0xff]
    %v46 = vld [vmem:[#allocation5] sm:$0xff]
    %v47 = vld [vmem:[#allocation5 + $0x8] sm:$0xff]
    %v48 = vsub.f32 %v44, %v46
    %v49 = vsub.f32 %v45, %v47
    %v50 = vand.u32 2147483647, %v48
    %v51 = vand.u32 2147483647, %v49
    %v52 = vmul.f32 %v50, 0.7
    %v53 = vmul.f32 %v51, 0.7
    %v54 = vadd.f32 %v52, 0.3
    %v55 = vadd.f32 %v53, 0.3
    %v56 = vmul.f32 %v50, %v54
    %v57 = vmul.f32 %v51, %v55
    %58 = vst [vmem:[#allocation7] sm:$0xff] %v56
    %59 = vst [vmem:[#allocation7 + $0x8] sm:$0xff] %v57
    // Predicated region
    $region18: #{tpu_custom_call.1} parent=1 // pred_check
      _
    $region19: #{tpu_custom_call.1} parent=1 // pred_check_branch
      %61 = sbr.rel (0) target = $region21
    $region20: #{tpu_custom_call.1} parent=1 // pred_region
      %63 = vsyncadd [#allocation4], 0
      %s64 = sshll.u32 [#allocation7], 4
      %s65 = int_to_ptr.vmem [resolvable:$true] %s64
      %s66 = sshll.u32 %s2, 4
      %s67 = int_to_ptr.hbm [resolvable:$true] %s66
      %72 = dma.vmem_to_hbm [thread:$0]  %s65, 256, %s67, [#allocation4], 128, 128, 8
    $region21: #{tpu_custom_call.1} parent=1 // pred_fallthru
      _
    // Predicated region
    $region22: #{tpu_custom_call.1} parent=1 // pred_check
      _
    $region23: #{tpu_custom_call.1} parent=1 // pred_check_branch
      %74 = sbr.rel (0) target = $region25
    $region24: #{tpu_custom_call.1} parent=1 // pred_region
      %76 = dma.done [#allocation4], 256
    $region25: #{tpu_custom_call.1} parent=1 // pred_fallthru
      _
    %77 = vsyncpa [#allocation3], 1
    %78 = vsyncpa [#allocation6], 1
    %79 = vsyncpa [#allocation4], 1

</llo_original>
